<compile_context>
chip_gen: v7x
topology: tpu7x:2x2x1
jax: 0.10.0
libtpu: 0.0.40
codegen_flags: <defaults>
</compile_context>

<pallas_src>
import math
import functools

import jax
import jax.numpy as jnp
from jax import lax
from jax.experimental import pallas as pl
from jax.experimental.pallas import tpu as pltpu


def _mha_kernel(*refs, num_heads, d_k, scale, has_mask, return_weights,
                bf16_exp, approx_recip):
    q_ref, k_ref, v_ref = refs[0], refs[1], refs[2]
    idx = 3
    mask_ref = None
    if has_mask:
        mask_ref = refs[idx]
        idx += 1
    o_ref = refs[idx]
    idx += 1
    w_ref = refs[idx] if return_weights else None
    acc_ref = refs[-1]                                  # (TQ, E) f32 scratch

    # (TQ, E) query tile with 1/sqrt(d_k) folded in; K/V tiles are (S, E).
    q = q_ref[0] * jnp.asarray(scale, dtype=q_ref.dtype)
    k = k_ref[0]
    v = v_ref[0]

    # Hoisted additive mask bias: one compare+select per tile, one add per head.
    bias = None
    if has_mask:
        m_tile = mask_ref[0]                            # (TQ, S) or (1, S) int32
        bias = jnp.where(m_tile == 0, jnp.float32(-1e9), jnp.float32(0.0))

    for h in range(num_heads):
        lo = h * d_k
        qh = q[:, lo:lo + d_k]                          # (TQ, d_k)
        kh = k[:, lo:lo + d_k]                          # (S,  d_k)
        vh = v[:, lo:lo + d_k]                          # (S,  d_k)

        # scores = (Q / sqrt(d_k)) K^T  -- contract on d_k, no explicit .T
        s = lax.dot_general(
            qh, kh, dimension_numbers=(((1,), (1,)), ((), ())),
            preferred_element_type=jnp.float32)         # (TQ, S) f32

        if bias is not None:
            s = s + bias

        # numerically stable softmax over keys
        m = jnp.max(s, axis=-1, keepdims=True)
        sm = s - m
        if bf16_exp:
            e = jnp.exp(sm.astype(jnp.bfloat16))        # bf16 EUP on v6e/v7x
            denom = jnp.sum(e.astype(jnp.float32), axis=-1, keepdims=True)
        else:
            e = jnp.exp(sm)
            denom = jnp.sum(e, axis=-1, keepdims=True)
        inv = pl.reciprocal(denom, approx=approx_recip)  # (TQ, 1) f32

        if return_weights:
            p = e.astype(jnp.float32) * inv
            w_ref[0, h] = p.astype(w_ref.dtype)
            out_h = jnp.dot(p.astype(vh.dtype), vh,
                            preferred_element_type=jnp.float32)
        else:
            # Deferred normalization: scale the small (TQ, d_k) result instead
            # of the (TQ, S) probability tile.
            out_h = jnp.dot(e.astype(vh.dtype), vh,
                            preferred_element_type=jnp.float32) * inv

        acc_ref[:, lo:lo + d_k] = out_h

    # Single lane-dense (TQ, E) store into the (B, S, E) output slab.
    o_ref[0] = acc_ref[...].astype(o_ref.dtype)


def _vmem_capacity_bytes():
    try:
        return int(pltpu.get_tpu_info().vmem_capacity_bytes)
    except Exception:
        return 64 * 1024 * 1024          # conservative (v7x per-TensorCore)


def _device_kind():
    try:
        return jax.devices()[0].device_kind.lower()
    except Exception:
        return ""


def _step_vmem_bytes(tq, seq_len, embed_dim, num_heads, itemsize,
                     return_weights, has_mask, mask_rows_tiled):
    """Per-grid-step VMEM footprint (double-buffered pipeline tiles + scratch)."""
    cost = 4 * seq_len * embed_dim * itemsize            # K + V (x2 buffers)
    cost += 4 * tq * embed_dim * itemsize                # Q in + O out (x2 buffers)
    if return_weights:
        cost += 2 * num_heads * tq * seq_len * itemsize  # weights out tile (x2)
    if has_mask:
        cost += 2 * (tq if mask_rows_tiled else 1) * seq_len * 4
    cost += tq * embed_dim * 4                           # f32 output scratch
    cost += 6 * tq * seq_len * 4                         # f32 softmax temporaries
    return cost


def _choose_query_tile(seq_len, embed_dim, num_heads, itemsize, return_weights,
                       has_mask, mask_rows_tiled, vmem_budget, min_tq=8):
    """Largest TQ dividing S whose real per-step VMEM footprint fits the budget."""
    candidates = [c for c in (512, 256, 128, 64, 32, 16, 8)
                  if c >= min_tq and seq_len % c == 0]
    if not candidates:
        return seq_len
    for tq in candidates:                                # largest first
        if _step_vmem_bytes(tq, seq_len, embed_dim, num_heads, itemsize,
                            return_weights, has_mask,
                            mask_rows_tiled) <= vmem_budget:
            return tq
    return candidates[-1]


def multi_head_attention_base(query, key, value, num_heads, mask=None,
                              return_weights=True, approx_softmax_recip=False):
    """Equivalent of MultiHeadAttentionBase.downstream (eval mode).

    query/key/value: (B, S, E).
    mask: optional (B, S, S), (B, 1, S), (S, S) or (1, S) — broadcast over heads,
          masked_fill(mask == 0, -1e9) semantics.
    Returns (concat, attn_weights): concat (B, S, E); attn_weights (B, H, S, S)
    in query.dtype, or None when return_weights=False (skips the dominant
    B*H*S*S HBM write).
    """
    B, S, E = query.shape
    assert E % num_heads == 0, "embed_dim must be divisible by num_heads"
    H = num_heads
    d_k = E // H
    scale = 1.0 / math.sqrt(d_k)

    itemsize = jnp.dtype(query.dtype).itemsize
    has_mask = mask is not None
    mask_arr = None
    mask_rows_tiled = False
    if has_mask:
        # PyTorch does mask.unsqueeze(1): the same mask broadcasts over heads.
        mask_arr = jnp.asarray(mask)
        if mask_arr.ndim == 2:
            mask_arr = mask_arr[None]                     # (1, rows, S)
        if mask_arr.shape[0] == 1 and B > 1:
            mask_arr = jnp.broadcast_to(mask_arr, (B,) + mask_arr.shape[1:])
        mask_arr = mask_arr.astype(jnp.int32)
        assert mask_arr.shape[0] == B and mask_arr.shape[-1] == S
        mask_rows_tiled = mask_arr.shape[1] != 1          # (B,S,S) vs (B,1,S)
        if mask_rows_tiled:
            assert mask_arr.shape[1] == S

    vmem_capacity = _vmem_capacity_bytes()
    min_tq = 16 if (itemsize < 4 and S >= 16) else 8      # keep sublanes full for bf16
    TQ = _choose_query_tile(S, E, H, itemsize, return_weights, has_mask,
                            mask_rows_tiled, int(vmem_capacity * 0.6), min_tq)
    nq = S // TQ

    # 2-D grid (batch, q-tile): megacore split lands on batch boundaries, and
    # the K/V block index is constant within a batch (no re-fetch across tiles).
    def qo_map(b, i):
        return (b, i, 0)

    def kv_map(b, i):
        return (b, 0, 0)

    def w_map(b, i):
        return (b, 0, i, 0)

    in_specs = [
        pl.BlockSpec((1, TQ, E), qo_map),   # Q  (lane-dense, all heads)
        pl.BlockSpec((1, S, E), kv_map),    # K
        pl.BlockSpec((1, S, E), kv_map),    # V
    ]
    args = [query, key, value]
    if has_mask:
        if mask_rows_tiled:
            in_specs.append(pl.BlockSpec((1, TQ, S), qo_map))
        else:
            in_specs.append(pl.BlockSpec((1, 1, S), kv_map))
        args.append(mask_arr)

    out_shape_o = jax.ShapeDtypeStruct((B, S, E), query.dtype)
    out_spec_o = pl.BlockSpec((1, TQ, E), qo_map)
    if return_weights:
        out_shape = (out_shape_o,
                     jax.ShapeDtypeStruct((B, H, S, S), query.dtype))
        out_specs = [out_spec_o, pl.BlockSpec((1, H, TQ, S), w_map)]
    else:
        out_shape = out_shape_o
        out_specs = out_spec_o

    est = _step_vmem_bytes(TQ, S, E, H, itemsize, return_weights, has_mask,
                           mask_rows_tiled)
    vmem_limit = int(min(max(est * 1.25, 32 * 1024 * 1024),
                         vmem_capacity * 0.85))
    vmem_limit = max(vmem_limit, int(est * 1.1))

    kind = _device_kind()
    is_v5 = ("v5e" in kind) or ("v5 lite" in kind) or ("v5litepod" in kind)
    bf16_exp = (query.dtype == jnp.bfloat16) and not is_v5

    kernel = functools.partial(
        _mha_kernel, num_heads=H, d_k=d_k, scale=scale, has_mask=has_mask,
        return_weights=return_weights, bf16_exp=bf16_exp,
        approx_recip=approx_softmax_recip)

    result = pl.pallas_call(
        kernel,
        out_shape=out_shape,
        grid_spec=pltpu.PrefetchScalarGridSpec(
            num_scalar_prefetch=0,
            grid=(B, nq),
            in_specs=in_specs,
            out_specs=out_specs,
            scratch_shapes=[pltpu.VMEM((TQ, E), jnp.float32)],
        ),
        compiler_params=pltpu.CompilerParams(
            dimension_semantics=("parallel", "arbitrary"),
            vmem_limit_bytes=vmem_limit,
        ),
    )(*args)

    if return_weights:
        concat, weights = result
        return concat, weights
    return result, None


def _reference(query, key, value, num_heads, mask=None):
    B, S, E = query.shape
    d_k = E // num_heads
    H = num_heads
    Q = query.reshape(B, S, H, d_k).transpose(0, 2, 1, 3).astype(jnp.float32)
    K = key.reshape(B, S, H, d_k).transpose(0, 2, 1, 3).astype(jnp.float32)
    V = value.reshape(B, S, H, d_k).transpose(0, 2, 1, 3).astype(jnp.float32)
    scores = jnp.einsum("bhqd,bhkd->bhqk", Q, K) / math.sqrt(d_k)
    if mask is not None:
        m = jnp.asarray(mask)
        if m.ndim == 2:
            m = jnp.broadcast_to(m, (B,) + m.shape)
        scores = jnp.where(m[:, None, :, :] == 0, -1e9, scores)
    p = jax.nn.softmax(scores, axis=-1)
    attn = jnp.einsum("bhqk,bhkd->bhqd", p, V)
    concat = attn.transpose(0, 2, 1, 3).reshape(B, S, E)
    return concat, p


if __name__ == "__main__":
    # Small shapes consistent with the module: batch=2, seq=8, embed_dim=32, heads=4.
    B, S, E, H = 2, 8, 32, 4
    key0 = jax.random.PRNGKey(0)
    kq, kk, kv = jax.random.split(key0, 3)
    query = jax.random.normal(kq, (B, S, E), dtype=jnp.float32)
    key_t = jax.random.normal(kk, (B, S, E), dtype=jnp.float32)
    value = jax.random.normal(kv, (B, S, E), dtype=jnp.float32)

    # 1) Full path: concat + attention weights.
    concat, attn_weights = multi_head_attention_base(query, key_t, value, H)
    concat = jax.block_until_ready(concat)
    attn_weights = jax.block_until_ready(attn_weights)
    ref_concat, ref_w = _reference(query, key_t, value, H)
    assert concat.shape == (B, S, E)
    assert attn_weights.shape == (B, H, S, S)
    assert jnp.allclose(concat, ref_concat, atol=1e-4, rtol=1e-4)
    assert jnp.allclose(attn_weights, ref_w, atol=1e-4, rtol=1e-4)

    # 2) concat-only fast path (no weights HBM write, deferred normalization,
    #    exact reciprocal by default -> tight tolerance).
    concat_only, w_none = multi_head_attention_base(
        query, key_t, value, H, return_weights=False)
    concat_only = jax.block_until_ready(concat_only)
    assert w_none is None
    assert jnp.allclose(concat_only, ref_concat, atol=1e-4, rtol=1e-4)

    # 3) Masked path (causal, (B,S,S)), matches masked_fill(mask == 0, -1e9).
    mask = jnp.broadcast_to(jnp.tril(jnp.ones((S, S), dtype=jnp.int32)), (B, S, S))
    concat_m, w_m = multi_head_attention_base(query, key_t, value, H, mask=mask)
    concat_m = jax.block_until_ready(concat_m)
    w_m = jax.block_until_ready(w_m)
    ref_concat_m, ref_w_m = _reference(query, key_t, value, H, mask=mask)
    assert jnp.allclose(concat_m, ref_concat_m, atol=1e-4, rtol=1e-4)
    assert jnp.allclose(w_m, ref_w_m, atol=1e-4, rtol=1e-4)

    # 4) Key-padding mask (B,1,S): passed un-broadcast (no S-fold blow-up).
    pad_mask = jnp.ones((B, 1, S), dtype=jnp.int32).at[1, 0, 5:].set(0)
    concat_p, w_p = multi_head_attention_base(query, key_t, value, H, mask=pad_mask)
    concat_p = jax.block_until_ready(concat_p)
    w_p = jax.block_until_ready(w_p)
    ref_concat_p, ref_w_p = _reference(query, key_t, value, H, mask=pad_mask)
    assert jnp.allclose(concat_p, ref_concat_p, atol=1e-4, rtol=1e-4)
    assert jnp.allclose(w_p, ref_w_p, atol=1e-4, rtol=1e-4)

    print("KERNEL_OK")
</pallas_src>

<mosaic_0001>
module attributes {stable_mosaic.version = 11 : i64} {
  func.func @_mha_kernel(%arg0: i32, %arg1: i32, %arg2: memref<1x8x32xf32, #tpu.memory_space<vmem>>, %arg3: memref<1x8x32xf32, #tpu.memory_space<vmem>>, %arg4: memref<1x8x32xf32, #tpu.memory_space<vmem>>, %arg5: memref<1x8x32xf32, #tpu.memory_space<vmem>>, %arg6: memref<1x4x8x8xf32, #tpu.memory_space<vmem>>, %arg7: memref<8x32xf32, #tpu.memory_space<vmem>>) attributes {dimension_semantics = [#tpu.dimension_semantics<parallel>, #tpu.dimension_semantics<arbitrary>], iteration_bounds = array<i64: 2, 1>, scalar_prefetch = 0 : i64, scratch_operands = 1 : i64, tpu.core_type = #tpu.core_type<tc>, window_params = [{transform_indices = @transform_0, window_bounds = array<i64: 1, 8, 32>}, {transform_indices = @transform_1, window_bounds = array<i64: 1, 8, 32>}, {transform_indices = @transform_2, window_bounds = array<i64: 1, 8, 32>}, {transform_indices = @transform_3, window_bounds = array<i64: 1, 8, 32>}, {transform_indices = @transform_4, window_bounds = array<i64: 1, 4, 8, 8>}]} {
    %c0 = arith.constant 0 : index
    %c0_0 = arith.constant 0 : index
    %c0_1 = arith.constant 0 : index
    %0 = vector.load %arg2[%c0, %c0_0, %c0_1] : memref<1x8x32xf32, #tpu.memory_space<vmem>>, vector<1x8x32xf32>
    %1 = vector.shape_cast %0 : vector<1x8x32xf32> to vector<8x32xf32>
    %cst = arith.constant 0.353553385 : f32
    %2 = vector.broadcast %cst : f32 to vector<8x32xf32>
    %3 = arith.mulf %1, %2 : vector<8x32xf32>
    %c0_2 = arith.constant 0 : index
    %c0_3 = arith.constant 0 : index
    %c0_4 = arith.constant 0 : index
    %4 = vector.load %arg3[%c0_2, %c0_3, %c0_4] : memref<1x8x32xf32, #tpu.memory_space<vmem>>, vector<1x8x32xf32>
    %5 = vector.shape_cast %4 : vector<1x8x32xf32> to vector<8x32xf32>
    %c0_5 = arith.constant 0 : index
    %c0_6 = arith.constant 0 : index
    %c0_7 = arith.constant 0 : index
    %6 = vector.load %arg4[%c0_5, %c0_6, %c0_7] : memref<1x8x32xf32, #tpu.memory_space<vmem>>, vector<1x8x32xf32>
    %7 = vector.shape_cast %6 : vector<1x8x32xf32> to vector<8x32xf32>
    %8 = vector.extract_strided_slice %3 {offsets = [0, 0], sizes = [8, 8], strides = [1, 1]} : vector<8x32xf32> to vector<8x8xf32>
    %9 = vector.extract_strided_slice %5 {offsets = [0, 0], sizes = [8, 8], strides = [1, 1]} : vector<8x32xf32> to vector<8x8xf32>
    %10 = vector.extract_strided_slice %7 {offsets = [0, 0], sizes = [8, 8], strides = [1, 1]} : vector<8x32xf32> to vector<8x8xf32>
    %cst_8 = arith.constant dense<0.000000e+00> : vector<8x8xf32>
    %11 = tpu.matmul %8, %9, %cst_8 {dimension_numbers = #tpu.dot_dimension_numbers<[1], [1], [0], [0], [0, 0, 1, 0], [], []>} : vector<8x8xf32>, vector<8x8xf32>, vector<8x8xf32> -> vector<8x8xf32>
    %cst_9 = arith.constant dense<0xFF800000> : vector<8xf32>
    %12 = vector.multi_reduction <maximumf>, %11, %cst_9 [1] : vector<8x8xf32> to vector<8xf32>
    %13 = vector.shape_cast %12 : vector<8xf32> to vector<8x1xf32>
    %14 = vector.broadcast %13 : vector<8x1xf32> to vector<8x8xf32>
    %15 = arith.subf %11, %14 : vector<8x8xf32>
    %16 = math.exp %15 : vector<8x8xf32>
    %cst_10 = arith.constant dense<0.000000e+00> : vector<8xf32>
    %17 = vector.multi_reduction <add>, %16, %cst_10 [1] : vector<8x8xf32> to vector<8xf32>
    %18 = vector.shape_cast %17 : vector<8xf32> to vector<8x1xf32>
    %19 = tpu.reciprocal %18 : vector<8x1xf32> -> vector<8x1xf32>
    %20 = vector.broadcast %19 : vector<8x1xf32> to vector<8x8xf32>
    %21 = arith.mulf %16, %20 : vector<8x8xf32>
    %c0_11 = arith.constant 0 : index
    %c0_12 = arith.constant 0 : index
    %c0_13 = arith.constant 0 : index
    %c0_14 = arith.constant 0 : index
    %22 = vector.load %arg6[%c0_11, %c0_12, %c0_13, %c0_14] : memref<1x4x8x8xf32, #tpu.memory_space<vmem>>, vector<1x1x8x8xf32>
    %23 = vector.shape_cast %22 : vector<1x1x8x8xf32> to vector<8x8xf32>
    %24 = vector.shape_cast %21 : vector<8x8xf32> to vector<1x1x8x8xf32>
    tpu.vector_store %arg6[%c0_11, %c0_12, %c0_13, %c0_14], %24 {strides = array<i32>} : memref<1x4x8x8xf32, #tpu.memory_space<vmem>>, vector<1x1x8x8xf32>,
    %cst_15 = arith.constant dense<0.000000e+00> : vector<8x8xf32>
    %25 = tpu.matmul %21, %10, %cst_15 {dimension_numbers = #tpu.dot_dimension_numbers<[1], [0], [0], [1], [0, 0, 1, 1], [], []>} : vector<8x8xf32>, vector<8x8xf32>, vector<8x8xf32> -> vector<8x8xf32>
    %c0_16 = arith.constant 0 : index
    %c0_17 = arith.constant 0 : index
    %26 = vector.load %arg7[%c0_16, %c0_17] : memref<8x32xf32, #tpu.memory_space<vmem>>, vector<8x8xf32>
    tpu.vector_store %arg7[%c0_16, %c0_17], %25 {strides = array<i32>} : memref<8x32xf32, #tpu.memory_space<vmem>>, vector<8x8xf32>,
    %27 = vector.extract_strided_slice %3 {offsets = [0, 8], sizes = [8, 8], strides = [1, 1]} : vector<8x32xf32> to vector<8x8xf32>
    %28 = vector.extract_strided_slice %5 {offsets = [0, 8], sizes = [8, 8], strides = [1, 1]} : vector<8x32xf32> to vector<8x8xf32>
    %29 = vector.extract_strided_slice %7 {offsets = [0, 8], sizes = [8, 8], strides = [1, 1]} : vector<8x32xf32> to vector<8x8xf32>
    %cst_18 = arith.constant dense<0.000000e+00> : vector<8x8xf32>
    %30 = tpu.matmul %27, %28, %cst_18 {dimension_numbers = #tpu.dot_dimension_numbers<[1], [1], [0], [0], [0, 0, 1, 0], [], []>} : vector<8x8xf32>, vector<8x8xf32>, vector<8x8xf32> -> vector<8x8xf32>
    %cst_19 = arith.constant dense<0xFF800000> : vector<8xf32>
    %31 = vector.multi_reduction <maximumf>, %30, %cst_19 [1] : vector<8x8xf32> to vector<8xf32>
    %32 = vector.shape_cast %31 : vector<8xf32> to vector<8x1xf32>
    %33 = vector.broadcast %32 : vector<8x1xf32> to vector<8x8xf32>
    %34 = arith.subf %30, %33 : vector<8x8xf32>
    %35 = math.exp %34 : vector<8x8xf32>
    %cst_20 = arith.constant dense<0.000000e+00> : vector<8xf32>
    %36 = vector.multi_reduction <add>, %35, %cst_20 [1] : vector<8x8xf32> to vector<8xf32>
    %37 = vector.shape_cast %36 : vector<8xf32> to vector<8x1xf32>
    %38 = tpu.reciprocal %37 : vector<8x1xf32> -> vector<8x1xf32>
    %39 = vector.broadcast %38 : vector<8x1xf32> to vector<8x8xf32>
    %40 = arith.mulf %35, %39 : vector<8x8xf32>
    %c0_21 = arith.constant 0 : index
    %c1 = arith.constant 1 : index
    %c0_22 = arith.constant 0 : index
    %c0_23 = arith.constant 0 : index
    %41 = vector.load %arg6[%c0_21, %c1, %c0_22, %c0_23] : memref<1x4x8x8xf32, #tpu.memory_space<vmem>>, vector<1x1x8x8xf32>
    %42 = vector.shape_cast %41 : vector<1x1x8x8xf32> to vector<8x8xf32>
    %43 = vector.shape_cast %40 : vector<8x8xf32> to vector<1x1x8x8xf32>
    tpu.vector_store %arg6[%c0_21, %c1, %c0_22, %c0_23], %43 {strides = array<i32>} : memref<1x4x8x8xf32, #tpu.memory_space<vmem>>, vector<1x1x8x8xf32>,
    %cst_24 = arith.constant dense<0.000000e+00> : vector<8x8xf32>
    %44 = tpu.matmul %40, %29, %cst_24 {dimension_numbers = #tpu.dot_dimension_numbers<[1], [0], [0], [1], [0, 0, 1, 1], [], []>} : vector<8x8xf32>, vector<8x8xf32>, vector<8x8xf32> -> vector<8x8xf32>
    %c0_25 = arith.constant 0 : index
    %c8 = arith.constant 8 : index
    %45 = vector.load %arg7[%c0_25, %c8] : memref<8x32xf32, #tpu.memory_space<vmem>>, vector<8x8xf32>
    tpu.vector_store %arg7[%c0_25, %c8], %44 {strides = array<i32>} : memref<8x32xf32, #tpu.memory_space<vmem>>, vector<8x8xf32>,
    %46 = vector.extract_strided_slice %3 {offsets = [0, 16], sizes = [8, 8], strides = [1, 1]} : vector<8x32xf32> to vector<8x8xf32>
    %47 = vector.extract_strided_slice %5 {offsets = [0, 16], sizes = [8, 8], strides = [1, 1]} : vector<8x32xf32> to vector<8x8xf32>
    %48 = vector.extract_strided_slice %7 {offsets = [0, 16], sizes = [8, 8], strides = [1, 1]} : vector<8x32xf32> to vector<8x8xf32>
    %cst_26 = arith.constant dense<0.000000e+00> : vector<8x8xf32>
    %49 = tpu.matmul %46, %47, %cst_26 {dimension_numbers = #tpu.dot_dimension_numbers<[1], [1], [0], [0], [0, 0, 1, 0], [], []>} : vector<8x8xf32>, vector<8x8xf32>, vector<8x8xf32> -> vector<8x8xf32>
    %cst_27 = arith.constant dense<0xFF800000> : vector<8xf32>
    %50 = vector.multi_reduction <maximumf>, %49, %cst_27 [1] : vector<8x8xf32> to vector<8xf32>
    %51 = vector.shape_cast %50 : vector<8xf32> to vector<8x1xf32>
    %52 = vector.broadcast %51 : vector<8x1xf32> to vector<8x8xf32>
    %53 = arith.subf %49, %52 : vector<8x8xf32>
    %54 = math.exp %53 : vector<8x8xf32>
    %cst_28 = arith.constant dense<0.000000e+00> : vector<8xf32>
    %55 = vector.multi_reduction <add>, %54, %cst_28 [1] : vector<8x8xf32> to vector<8xf32>
    %56 = vector.shape_cast %55 : vector<8xf32> to vector<8x1xf32>
    %57 = tpu.reciprocal %56 : vector<8x1xf32> -> vector<8x1xf32>
    %58 = vector.broadcast %57 : vector<8x1xf32> to vector<8x8xf32>
    %59 = arith.mulf %54, %58 : vector<8x8xf32>
    %c0_29 = arith.constant 0 : index
    %c2 = arith.constant 2 : index
    %c0_30 = arith.constant 0 : index
    %c0_31 = arith.constant 0 : index
    %60 = vector.load %arg6[%c0_29, %c2, %c0_30, %c0_31] : memref<1x4x8x8xf32, #tpu.memory_space<vmem>>, vector<1x1x8x8xf32>
    %61 = vector.shape_cast %60 : vector<1x1x8x8xf32> to vector<8x8xf32>
    %62 = vector.shape_cast %59 : vector<8x8xf32> to vector<1x1x8x8xf32>
    tpu.vector_store %arg6[%c0_29, %c2, %c0_30, %c0_31], %62 {strides = array<i32>} : memref<1x4x8x8xf32, #tpu.memory_space<vmem>>, vector<1x1x8x8xf32>,
    %cst_32 = arith.constant dense<0.000000e+00> : vector<8x8xf32>
    %63 = tpu.matmul %59, %48, %cst_32 {dimension_numbers = #tpu.dot_dimension_numbers<[1], [0], [0], [1], [0, 0, 1, 1], [], []>} : vector<8x8xf32>, vector<8x8xf32>, vector<8x8xf32> -> vector<8x8xf32>
    %c0_33 = arith.constant 0 : index
    %c16 = arith.constant 16 : index
    %64 = vector.load %arg7[%c0_33, %c16] : memref<8x32xf32, #tpu.memory_space<vmem>>, vector<8x8xf32>
    tpu.vector_store %arg7[%c0_33, %c16], %63 {strides = array<i32>} : memref<8x32xf32, #tpu.memory_space<vmem>>, vector<8x8xf32>,
    %65 = vector.extract_strided_slice %3 {offsets = [0, 24], sizes = [8, 8], strides = [1, 1]} : vector<8x32xf32> to vector<8x8xf32>
    %66 = vector.extract_strided_slice %5 {offsets = [0, 24], sizes = [8, 8], strides = [1, 1]} : vector<8x32xf32> to vector<8x8xf32>
    %67 = vector.extract_strided_slice %7 {offsets = [0, 24], sizes = [8, 8], strides = [1, 1]} : vector<8x32xf32> to vector<8x8xf32>
    %cst_34 = arith.constant dense<0.000000e+00> : vector<8x8xf32>
    %68 = tpu.matmul %65, %66, %cst_34 {dimension_numbers = #tpu.dot_dimension_numbers<[1], [1], [0], [0], [0, 0, 1, 0], [], []>} : vector<8x8xf32>, vector<8x8xf32>, vector<8x8xf32> -> vector<8x8xf32>
    %cst_35 = arith.constant dense<0xFF800000> : vector<8xf32>
    %69 = vector.multi_reduction <maximumf>, %68, %cst_35 [1] : vector<8x8xf32> to vector<8xf32>
    %70 = vector.shape_cast %69 : vector<8xf32> to vector<8x1xf32>
    %71 = vector.broadcast %70 : vector<8x1xf32> to vector<8x8xf32>
    %72 = arith.subf %68, %71 : vector<8x8xf32>
    %73 = math.exp %72 : vector<8x8xf32>
    %cst_36 = arith.constant dense<0.000000e+00> : vector<8xf32>
    %74 = vector.multi_reduction <add>, %73, %cst_36 [1] : vector<8x8xf32> to vector<8xf32>
    %75 = vector.shape_cast %74 : vector<8xf32> to vector<8x1xf32>
    %76 = tpu.reciprocal %75 : vector<8x1xf32> -> vector<8x1xf32>
    %77 = vector.broadcast %76 : vector<8x1xf32> to vector<8x8xf32>
    %78 = arith.mulf %73, %77 : vector<8x8xf32>
    %c0_37 = arith.constant 0 : index
    %c3 = arith.constant 3 : index
    %c0_38 = arith.constant 0 : index
    %c0_39 = arith.constant 0 : index
    %79 = vector.load %arg6[%c0_37, %c3, %c0_38, %c0_39] : memref<1x4x8x8xf32, #tpu.memory_space<vmem>>, vector<1x1x8x8xf32>
    %80 = vector.shape_cast %79 : vector<1x1x8x8xf32> to vector<8x8xf32>
    %81 = vector.shape_cast %78 : vector<8x8xf32> to vector<1x1x8x8xf32>
    tpu.vector_store %arg6[%c0_37, %c3, %c0_38, %c0_39], %81 {strides = array<i32>} : memref<1x4x8x8xf32, #tpu.memory_space<vmem>>, vector<1x1x8x8xf32>,
    %cst_40 = arith.constant dense<0.000000e+00> : vector<8x8xf32>
    %82 = tpu.matmul %78, %67, %cst_40 {dimension_numbers = #tpu.dot_dimension_numbers<[1], [0], [0], [1], [0, 0, 1, 1], [], []>} : vector<8x8xf32>, vector<8x8xf32>, vector<8x8xf32> -> vector<8x8xf32>
    %c0_41 = arith.constant 0 : index
    %c24 = arith.constant 24 : index
    %83 = vector.load %arg7[%c0_41, %c24] : memref<8x32xf32, #tpu.memory_space<vmem>>, vector<8x8xf32>
    tpu.vector_store %arg7[%c0_41, %c24], %82 {strides = array<i32>} : memref<8x32xf32, #tpu.memory_space<vmem>>, vector<8x8xf32>,
    %c0_42 = arith.constant 0 : index
    %c0_43 = arith.constant 0 : index
    %84 = vector.load %arg7[%c0_42, %c0_43] : memref<8x32xf32, #tpu.memory_space<vmem>>, vector<8x32xf32>
    %c0_44 = arith.constant 0 : index
    %c0_45 = arith.constant 0 : index
    %c0_46 = arith.constant 0 : index
    %85 = vector.load %arg5[%c0_44, %c0_45, %c0_46] : memref<1x8x32xf32, #tpu.memory_space<vmem>>, vector<1x8x32xf32>
    %86 = vector.shape_cast %85 : vector<1x8x32xf32> to vector<8x32xf32>
    %87 = vector.shape_cast %84 : vector<8x32xf32> to vector<1x8x32xf32>
    tpu.vector_store %arg5[%c0_44, %c0_45, %c0_46], %87 {strides = array<i32>} : memref<1x8x32xf32, #tpu.memory_space<vmem>>, vector<1x8x32xf32>,
    return
  }
  func.func @transform_0(%arg0: i32, %arg1: i32) -> (i32, i32, i32) {
    %c0_i32 = arith.constant 0 : i32
    %c0_i32_0 = arith.constant 0 : i32
    return %arg0, %arg1, %c0_i32 : i32, i32, i32
  }
  func.func @transform_1(%arg0: i32, %arg1: i32) -> (i32, i32, i32) {
    %c0_i32 = arith.constant 0 : i32
    %c0_i32_0 = arith.constant 0 : i32
    %c0_i32_1 = arith.constant 0 : i32
    return %arg0, %c0_i32, %c0_i32_0 : i32, i32, i32
  }
  func.func @transform_2(%arg0: i32, %arg1: i32) -> (i32, i32, i32) {
    %c0_i32 = arith.constant 0 : i32
    %c0_i32_0 = arith.constant 0 : i32
    %c0_i32_1 = arith.constant 0 : i32
    return %arg0, %c0_i32, %c0_i32_0 : i32, i32, i32
  }
  func.func @transform_3(%arg0: i32, %arg1: i32) -> (i32, i32, i32) {
    %c0_i32 = arith.constant 0 : i32
    %c0_i32_0 = arith.constant 0 : i32
    return %arg0, %arg1, %c0_i32 : i32, i32, i32
  }
  func.func @transform_4(%arg0: i32, %arg1: i32) -> (i32, i32, i32, i32) {
    %c0_i32 = arith.constant 0 : i32
    %c0_i32_0 = arith.constant 0 : i32
    %c0_i32_1 = arith.constant 0 : i32
    return %arg0, %c0_i32, %arg1, %c0_i32_0 : i32, i32, i32, i32
  }
}

</mosaic_0001>

<llo_original>
// kernel: tpu_custom_call.1
$region0: #{tpu_custom_call.1}
  #allocation0 [shape = 'u32[]', space=smem, size = 0x4, offset = 0x4, fixed_abs, tag = 'smem constant byte address 0x4 - core index']
  #allocation1 [shape = 'u32[144,128]{1,0:T(1,128)}', space=vmem, size = 0x12000, scoped, tag = 'internal scratch']
  #allocation2 [shape = 'f32[8,32]{1,0:T(8,128)}', space=vmem, size = 0x1000, scoped, tag = 'scratch operand']
  %s0 = inlined_call_operand.hbm [shape: f32[2,8,32], index: 0, kind: input, shape index: {}]
  %s1 = inlined_call_operand.hbm [shape: f32[2,8,32], index: 1, kind: input, shape index: {}]
  %s2 = inlined_call_operand.hbm [shape: f32[2,8,32], index: 2, kind: input, shape index: {}]
  %s3 = inlined_call_operand.hbm [shape: f32[2,8,32], index: 3, kind: output, shape index: {0}]
  %s4 = inlined_call_operand.hbm [shape: f32[2,4,8,8], index: 4, kind: output, shape index: {1}]
  %5 = xla_tuple %s3, %s4
  %s6 = sld [smem:[#allocation0]]
  $region65: #{tpu_custom_call.1} parent=0
    _
  %s8 = ssub.s32 1, %s6
  %s9 = scalar_select 0, %s8, %s6
  $region1: #{tpu_custom_call.1} parent=0
    #allocation3 [shape = 'u8[8192]{0}', space=vmem, size = 0x2000, scoped, tag = 'input window, operand 0']
    #allocation4 [shape = 's32[2]{0}', space=sflag, size = 0x8, scoped, tag = 'scoped memory for tpu_custom_call.1']
    #allocation5 [shape = 's32[2]{0}', space=sflag, size = 0x8, scoped, tag = 'scoped memory for tpu_custom_call.1']
    #allocation6 [shape = 'u8[8192]{0}', space=vmem, size = 0x2000, scoped, tag = 'input window, operand 1']
    #allocation7 [shape = 's32[2]{0}', space=sflag, size = 0x8, scoped, tag = 'scoped memory for tpu_custom_call.1']
    #allocation8 [shape = 'u8[8192]{0}', space=vmem, size = 0x2000, scoped, tag = 'input window, operand 2']
    #allocation9 [shape = 'u8[8192]{0}', space=vmem, size = 0x2000, scoped, tag = 'output window, operand 0']
    #allocation10 [shape = 'u8[32768]{0}', space=vmem, size = 0x8000, scoped, tag = 'output window, operand 1']
    #allocation11 [shape = 's32[2]{0}', space=sflag, size = 0x8, scoped, tag = 'scoped memory for tpu_custom_call.1']
    %10 = vsyncpa [#allocation4], 0
    %s11 = scalar_lea.sflag [#allocation4], 1
    %12 = vsyncpa %s11, 0
    %13 = vsyncpa [#allocation7], 0
    %s14 = scalar_lea.sflag [#allocation7], 1
    %15 = vsyncpa %s14, 0
    %16 = vsyncpa [#allocation5], 0
    %s17 = scalar_lea.sflag [#allocation5], 1
    %18 = vsyncpa %s17, 0
    %19 = vsyncpa [#allocation11], 0
    %s20 = scalar_lea.sflag [#allocation11], 1
    %21 = vsyncpa %s20, 0
    loop: start=0, step=1, limit=4
    $region2: #{tpu_custom_call.1} parent=1 // loop_pre_header
      _
    $region3: #{tpu_custom_call.1} parent=1 // loop_header
      %s23 = sphi 0, %s27
      %p24 = scmp.ge.s32.totalorder %s23, 4
      %s30 = sphi 0, %s42
      %s31 = sphi 0, %s38
      %s32 = sphi 0, %s30
      %s33 = sphi 0, %s31
      %s34 = sphi 0, %s32
      %s35 = sphi 0, %s33
      %s47 = sphi 0, %s49
      %s50 = sphi 0, %s47
      %s51 = sphi 0, %s50
      %s67 = sphi 0, %s51
      %s73 = sphi 0, %s75
      %s76 = sphi 0, %s73
      %s77 = sphi 0, %s76
      %s93 = sphi 0, %s77
      %s99 = sphi 0, %s101
      %s102 = sphi 0, %s99
      %s103 = sphi 0, %s102
      %s119 = sphi 0, %s103
      %s127 = sphi 0, %s129
      %s130 = sphi 0, %s127
      %s131 = sphi 0, %s130
      %s147 = sphi 0, %s131
      %s155 = sphi 0, %s157
      %s158 = sphi 0, %s155
      %s159 = sphi 0, %s158
      %s175 = sphi 0, %s159
    $region4: #{tpu_custom_call.1} parent=1 // loop_header_branch
      %26 = sbr.rel (%p24) target = $region8
    $region5: #{tpu_custom_call.1} parent=1 // loop_body
      %s28 = ssub.s32 %s23, 1
      %s29 = ssub.s32 %s23, 2
      %s36 = sadd.s32 1, %s31
      %p37 = scmp.ge.s32.totalorder %s36, 1
      %s38 = scalar_select %p37, 0, %s36
      %s39 = sadd.s32 1, %s30
      %s40 = scalar_select %p37, %s39, %s30
      %p41 = scmp.ge.s32.totalorder %s40, 2
      %s42 = scalar_select %p41, 0, %s40
      %s43 = ssub.s32 %s30, %s42
      %s44 = ssub.s32 %s31, %s38
      %s45 = sor.u32 %s43, %s44
      %p46 = scmp.eq.s32.totalorder %s45, 0
      %s48 = sadd.s32 %s47, 1
      %s49 = scalar_select %p46, %s47, %s48
      %p52 = pneg %p46
      %p53 = scmp.eq.s32.totalorder %s23, 1
      %p54 = por %p52, %p53
      %p55 = scmp.ne.s32.totalorder %s47, %s50
      %p56 = scmp.eq.s32.totalorder %s23, 0
      %p57 = por %p55, %p56
      %p58 = scmp.ne.s32.totalorder %s47, %s50
      %p59 = scmp.eq.s32.totalorder %s28, 1
      %p60 = por %p58, %p59
      %p61 = scmp.ne.s32.totalorder %s50, %s51
      %p62 = scmp.eq.s32.totalorder %s28, 0
      %p63 = por %p61, %p62
      %p64 = scmp.ne.s32.totalorder %s50, %s51
      %p65 = scmp.eq.s32.totalorder %s29, 1
      %p66 = por %p64, %p65
      %p68 = scmp.ne.s32.totalorder %s51, %s67
      %p69 = scmp.eq.s32.totalorder %s29, 0
      %p70 = por %p68, %p69
      %s71 = ssub.s32 %s30, %s42
      %p72 = scmp.eq.s32.totalorder %s71, 0
      %s74 = sadd.s32 %s73, 1
      %s75 = scalar_select %p72, %s73, %s74
      %p78 = pneg %p72
      %p79 = scmp.eq.s32.totalorder %s23, 1
      %p80 = por %p78, %p79
      %p81 = scmp.ne.s32.totalorder %s73, %s76
      %p82 = scmp.eq.s32.totalorder %s23, 0
      %p83 = por %p81, %p82
      %p84 = scmp.ne.s32.totalorder %s73, %s76
      %p85 = scmp.eq.s32.totalorder %s28, 1
      %p86 = por %p84, %p85
      %p87 = scmp.ne.s32.totalorder %s76, %s77
      %p88 = scmp.eq.s32.totalorder %s28, 0
      %p89 = por %p87, %p88
      %p90 = scmp.ne.s32.totalorder %s76, %s77
      %p91 = scmp.eq.s32.totalorder %s29, 1
      %p92 = por %p90, %p91
      %p94 = scmp.ne.s32.totalorder %s77, %s93
      %p95 = scmp.eq.s32.totalorder %s29, 0
      %p96 = por %p94, %p95
      %s97 = ssub.s32 %s30, %s42
      %p98 = scmp.eq.s32.totalorder %s97, 0
      %s100 = sadd.s32 %s99, 1
      %s101 = scalar_select %p98, %s99, %s100
      %p104 = pneg %p98
      %p105 = scmp.eq.s32.totalorder %s23, 1
      %p106 = por %p104, %p105
      %p107 = scmp.ne.s32.totalorder %s99, %s102
      %p108 = scmp.eq.s32.totalorder %s23, 0
      %p109 = por %p107, %p108
      %p110 = scmp.ne.s32.totalorder %s99, %s102
      %p111 = scmp.eq.s32.totalorder %s28, 1
      %p112 = por %p110, %p111
      %p113 = scmp.ne.s32.totalorder %s102, %s103
      %p114 = scmp.eq.s32.totalorder %s28, 0
      %p115 = por %p113, %p114
      %p116 = scmp.ne.s32.totalorder %s102, %s103
      %p117 = scmp.eq.s32.totalorder %s29, 1
      %p118 = por %p116, %p117
      %p120 = scmp.ne.s32.totalorder %s103, %s119
      %p121 = scmp.eq.s32.totalorder %s29, 0
      %p122 = por %p120, %p121
      %s123 = ssub.s32 %s30, %s42
      %s124 = ssub.s32 %s31, %s38
      %s125 = sor.u32 %s123, %s124
      %p126 = scmp.eq.s32.totalorder %s125, 0
      %s128 = sadd.s32 %s127, 1
      %s129 = scalar_select %p126, %s127, %s128
      %p132 = pneg %p126
      %p133 = scmp.eq.s32.totalorder %s23, 1
      %p134 = por %p132, %p133
      %p135 = scmp.ne.s32.totalorder %s127, %s130
      %p136 = scmp.eq.s32.totalorder %s23, 0
      %p137 = por %p135, %p136
      %p138 = scmp.ne.s32.totalorder %s127, %s130
      %p139 = scmp.eq.s32.totalorder %s28, 1
      %p140 = por %p138, %p139
      %p141 = scmp.ne.s32.totalorder %s130, %s131
      %p142 = scmp.eq.s32.totalorder %s28, 0
      %p143 = por %p141, %p142
      %p144 = scmp.ne.s32.totalorder %s130, %s131
      %p145 = scmp.eq.s32.totalorder %s29, 1
      %p146 = por %p144, %p145
      %p148 = scmp.ne.s32.totalorder %s131, %s147
      %p149 = scmp.eq.s32.totalorder %s29, 0
      %p150 = por %p148, %p149
      %s151 = ssub.s32 %s30, %s42
      %s152 = ssub.s32 %s31, %s38
      %s153 = sor.u32 %s151, %s152
      %p154 = scmp.eq.s32.totalorder %s153, 0
      %s156 = sadd.s32 %s155, 1
      %s157 = scalar_select %p154, %s155, %s156
      %p160 = pneg %p154
      %p161 = scmp.eq.s32.totalorder %s23, 1
      %p162 = por %p160, %p161
      %p163 = scmp.ne.s32.totalorder %s155, %s158
      %p164 = scmp.eq.s32.totalorder %s23, 0
      %p165 = por %p163, %p164
      %p166 = scmp.ne.s32.totalorder %s155, %s158
      %p167 = scmp.eq.s32.totalorder %s28, 1
      %p168 = por %p166, %p167
      %p169 = scmp.ne.s32.totalorder %s158, %s159
      %p170 = scmp.eq.s32.totalorder %s28, 0
      %p171 = por %p169, %p170
      %p172 = scmp.ne.s32.totalorder %s158, %s159
      %p173 = scmp.eq.s32.totalorder %s29, 1
      %p174 = por %p172, %p173
      %p176 = scmp.ne.s32.totalorder %s159, %s175
      %p177 = scmp.eq.s32.totalorder %s29, 0
      %p178 = por %p176, %p177
      %p179 = scmp.le.s32.totalorder 1, %s23
      %p180 = scmp.lt.s32.totalorder %s23, 3
      %p181 = pnand %p179, %p180
      %p182 = pneg %p181
      // Predicated region
      $region9: #{tpu_custom_call.1} parent=5 // pred_check
        _
      $region10: #{tpu_custom_call.1} parent=5 // pred_check_branch
        %184 = sbr.rel (%p181) target = $region12
      $region11: #{tpu_custom_call.1} parent=5 // pred_region
        %s185 = ssub.s32 %s23, 1
      $region12: #{tpu_custom_call.1} parent=5 // pred_fallthru
        _
      %p186 = scmp.lt.s32.totalorder %s23, 2
      // Predicated region
      $region13: #{tpu_custom_call.1} parent=5 // pred_check
        %p187 = pneg %p186
      $region14: #{tpu_custom_call.1} parent=5 // pred_check_branch
        %189 = sbr.rel (%p187) target = $region16
      $region15: #{tpu_custom_call.1} parent=5 // pred_region
        // Predicated region
        $region17: #{tpu_custom_call.1} parent=15 // pred_check
          %p190 = pneg %p57
        $region18: #{tpu_custom_call.1} parent=15 // pred_check_branch
          %192 = sbr.rel (%p190) target = $region20
        $region19: #{tpu_custom_call.1} parent=15 // pred_region
          %s193 = sand.u32 %s47, 1
          %s194 = scalar_lea.sflag [#allocation4], %s193
          %s195 = sand.u32 %s47, 1
          %s196 = smul.addr %s195, 8
          %s197 = scalar_lea.vmem [#allocation3], %s196
          %s199 = ssub.s32 128, 128
          %200 = vsyncadd %s194, %s199
          %s201 = sadd.s32 %s31, %s30
          %s202 = smul.addr %s201, 128
          %s203 = scalar_lea.hbm %s0, %s202
          %s205 = sshll.u32 %s197, 4
          %s206 = int_to_ptr.vmem [resolvable:$true] %s205
          %208 = dma.hbm_to_vmem [thread:$0]  %s203, 128, %s206, %s194
        $region20: #{tpu_custom_call.1} parent=15 // pred_fallthru
          _
        // Predicated region
        $region21: #{tpu_custom_call.1} parent=15 // pred_check
          %p209 = pneg %p83
        $region22: #{tpu_custom_call.1} parent=15 // pred_check_branch
          %211 = sbr.rel (%p209) target = $region24
        $region23: #{tpu_custom_call.1} parent=15 // pred_region
          %s212 = sand.u32 %s23, 1
          %s213 = scalar_lea.sflag [#allocation7], %s212
          %s214 = sand.u32 %s73, 1
          %s215 = smul.addr %s214, 8
          %s216 = scalar_lea.vmem [#allocation6], %s215
          %s218 = ssub.s32 128, 128
          %219 = vsyncadd %s213, %s218
          %s220 = smul.addr %s30, 128
          %s221 = scalar_lea.hbm %s1, %s220
          %s223 = sshll.u32 %s216, 4
          %s224 = int_to_ptr.vmem [resolvable:$true] %s223
          %226 = dma.hbm_to_vmem [thread:$0]  %s221, 128, %s224, %s213
        $region24: #{tpu_custom_call.1} parent=15 // pred_fallthru
          _
        // Predicated region
        $region25: #{tpu_custom_call.1} parent=15 // pred_check
          %p227 = pneg %p109
        $region26: #{tpu_custom_call.1} parent=15 // pred_check_branch
          %229 = sbr.rel (%p227) target = $region28
        $region27: #{tpu_custom_call.1} parent=15 // pred_region
          %s230 = sand.u32 %s23, 1
          %s231 = scalar_lea.sflag [#allocation7], %s230
          %s232 = sand.u32 %s99, 1
          %s233 = smul.addr %s232, 8
          %s234 = scalar_lea.vmem [#allocation8], %s233
          %s236 = ssub.s32 128, 128
          %237 = vsyncadd %s231, %s236
          %s238 = smul.addr %s30, 128
          %s239 = scalar_lea.hbm %s2, %s238
          %s241 = sshll.u32 %s234, 4
          %s242 = int_to_ptr.vmem [resolvable:$true] %s241
          %244 = dma.hbm_to_vmem [thread:$0]  %s239, 128, %s242, %s231
        $region28: #{tpu_custom_call.1} parent=15 // pred_fallthru
          _
      $region16: #{tpu_custom_call.1} parent=5 // pred_fallthru
        _
      %p245 = scmp.le.s32.totalorder 1, %s23
      %p246 = scmp.lt.s32.totalorder %s23, 3
      %p247 = pnand %p245, %p246
      %p248 = pneg %p247
      // Predicated region
      $region29: #{tpu_custom_call.1} parent=5 // pred_check
        _
      $region30: #{tpu_custom_call.1} parent=5 // pred_check_branch
        %250 = sbr.rel (%p247) target = $region32
      $region31: #{tpu_custom_call.1} parent=5 // pred_region
        %s251 = ssub.s32 %s23, 1
        %s252 = sand.u32 %s50, 1
        %s253 = scalar_lea.sflag [#allocation4], %s252
        %s254 = sand.u32 %s50, 1
        %s255 = smul.addr %s254, 8
        %s256 = scalar_lea.vmem [#allocation3], %s255
        // Predicated region
        $region33: #{tpu_custom_call.1} parent=31 // pred_check
          %p257 = pneg %p63
        $region34: #{tpu_custom_call.1} parent=31 // pred_check_branch
          %259 = sbr.rel (%p257) target = $region36
        $region35: #{tpu_custom_call.1} parent=31 // pred_region
          %260 = dma.done %s253, 128
        $region36: #{tpu_custom_call.1} parent=31 // pred_fallthru
          _
        %s261 = sand.u32 %s28, 1
        %s262 = scalar_lea.sflag [#allocation7], %s261
        %s263 = sand.u32 %s76, 1
        %s264 = smul.addr %s263, 8
        %s265 = scalar_lea.vmem [#allocation6], %s264
        // Predicated region
        $region37: #{tpu_custom_call.1} parent=31 // pred_check
          %p266 = pneg %p89
        $region38: #{tpu_custom_call.1} parent=31 // pred_check_branch
          %268 = sbr.rel (%p266) target = $region40
        $region39: #{tpu_custom_call.1} parent=31 // pred_region
          %269 = dma.done %s262, 128
        $region40: #{tpu_custom_call.1} parent=31 // pred_fallthru
          _
        %s270 = sand.u32 %s28, 1
        %s271 = scalar_lea.sflag [#allocation7], %s270
        %s272 = sand.u32 %s102, 1
        %s273 = smul.addr %s272, 8
        %s274 = scalar_lea.vmem [#allocation8], %s273
        // Predicated region
        $region41: #{tpu_custom_call.1} parent=31 // pred_check
          %p275 = pneg %p115
        $region42: #{tpu_custom_call.1} parent=31 // pred_check_branch
          %277 = sbr.rel (%p275) target = $region44
        $region43: #{tpu_custom_call.1} parent=31 // pred_region
          %278 = dma.done %s271, 128
        $region44: #{tpu_custom_call.1} parent=31 // pred_fallthru
          _
        %s279 = sand.u32 %s50, 1
        %s280 = scalar_lea.sflag [#allocation4], %s279
        %s281 = sand.u32 %s50, 1
        %s282 = smul.addr %s281, 8
        %s283 = scalar_lea.vmem [#allocation3], %s282
        %p284 = pneg %p63
        %p285 = pneg %p60
        %s286 = sand.u32 %s28, 1
        %s287 = scalar_lea.sflag [#allocation7], %s286
        %s288 = sand.u32 %s76, 1
        %s289 = smul.addr %s288, 8
        %s290 = scalar_lea.vmem [#allocation6], %s289
        %p291 = pneg %p89
        %p292 = pneg %p86
        %s293 = sand.u32 %s28, 1
        %s294 = scalar_lea.sflag [#allocation7], %s293
        %s295 = sand.u32 %s102, 1
        %s296 = smul.addr %s295, 8
        %s297 = scalar_lea.vmem [#allocation8], %s296
        %p298 = pneg %p115
        %p299 = pneg %p112
        %p300 = pneg %p143
        %p301 = pneg %p140
        %s302 = sand.u32 %s130, 1
        %s303 = scalar_lea.sflag [#allocation5], %s302
        %s304 = sand.u32 %s130, 1
        %s305 = smul.addr %s304, 8
        %s306 = scalar_lea.vmem [#allocation9], %s305
        %p307 = pneg %p171
        %p308 = pneg %p168
        %s309 = sand.u32 %s158, 1
        %s310 = scalar_lea.sflag [#allocation11], %s309
        %s311 = sand.u32 %s158, 1
        %s312 = smul.addr %s311, 32
        %s313 = scalar_lea.vmem [#allocation10], %s312
        %v314 = vld [vmem:[%s256] sm:$0xff]
        %v315 = vmul.f32 %v314, 0.35355338
        %v316 = vld [vmem:[%s265] sm:$0xff]
        %v317 = vld [vmem:[%s274] sm:$0xff]
        %vm318 = vcmask 64512
        %v320 = vsel %vm318, %v315, 0
        %v323 = vsel %vm318, %v316, 0
        %325 = vmatprep.subr.mxu0 0.0
        %326 = vmatpush1.xpose.msra.mxu0 %v323
        %327 = vmatprep.subr.mxu0 0.0
        %328 = vmatpush1.xpose.msra.mxu0 0.0
        %329 = vmatprep.subr.mxu0 0.0
        %330 = vmatpush1.xpose.msra.mxu0 0.0
        %331 = vmatprep.subr.mxu0 0.0
        %332 = vmatpush1.xpose.msra.mxu0 0.0
        %333 = vmatprep.subr.mxu0 0.0
        %334 = vmatpush1.xpose.msra.mxu0 0.0
        %335 = vmatprep.subr.mxu0 0.0
        %336 = vmatpush1.xpose.msra.mxu0 0.0
        %337 = vmatprep.subr.mxu0 0.0
        %338 = vmatpush1.xpose.msra.mxu0 0.0
        %339 = vmatprep.subr.mxu0 0.0
        %340 = vmatpush1.xpose.msra.mxu0 0.0
        %341 = vmatprep.subr.mxu0 0.0
        %342 = vmatpush1.xpose.msra.mxu0 0.0
        %343 = vmatprep.subr.mxu0 0.0
        %344 = vmatpush1.xpose.msra.mxu0 0.0
        %345 = vmatprep.subr.mxu0 0.0
        %346 = vmatpush1.xpose.msra.mxu0 0.0
        %347 = vmatprep.subr.mxu0 0.0
        %348 = vmatpush1.xpose.msra.mxu0 0.0
        %349 = vmatprep.subr.mxu0 0.0
        %350 = vmatpush1.xpose.msra.mxu0 0.0
        %351 = vmatprep.subr.mxu0 0.0
        %352 = vmatpush1.xpose.msra.mxu0 0.0
        %353 = vmatprep.subr.mxu0 0.0
        %354 = vmatpush1.xpose.msra.mxu0 0.0
        %355 = vmatprep.subr.mxu0 0.0
        %356 = vmatpush1.xpose.msra.mxu0 0.0
        %357 = vmatprep.subr.mxu0 0.0
        %358 = vmatpush1.xpose.msra.mxu0 0.0
        %359 = vmatprep.subr.mxu0 0.0
        %360 = vmatpush1.xpose.msra.mxu0 0.0
        %361 = vmatprep.subr.mxu0 0.0
        %362 = vmatpush1.xpose.msra.mxu0 0.0
        %363 = vmatprep.subr.mxu0 0.0
        %364 = vmatpush1.xpose.msra.mxu0 0.0
        %365 = vmatprep.subr.mxu0 0.0
        %366 = vmatpush1.xpose.msra.mxu0 0.0
        %367 = vmatprep.subr.mxu0 0.0
        %368 = vmatpush1.xpose.msra.mxu0 0.0
        %369 = vmatprep.subr.mxu0 0.0
        %370 = vmatpush1.xpose.msra.mxu0 0.0
        %371 = vmatprep.subr.mxu0 0.0
        %372 = vmatpush1.xpose.msra.mxu0 0.0
        %373 = vmatprep.subr.mxu0 0.0
        %374 = vmatpush1.xpose.msra.mxu0 0.0
        %375 = vmatprep.subr.mxu0 0.0
        %376 = vmatpush1.xpose.msra.mxu0 0.0
        %377 = vmatprep.subr.mxu0 0.0
        %378 = vmatpush1.xpose.msra.mxu0 0.0
        %379 = vmatprep.subr.mxu0 0.0
        %380 = vmatpush1.xpose.msra.mxu0 0.0
        %381 = vmatprep.subr.mxu0 0.0
        %382 = vmatpush1.xpose.msra.mxu0 0.0
        %383 = vmatprep.subr.mxu0 0.0
        %384 = vmatpush1.xpose.msra.mxu0 0.0
        %385 = vmatprep.subr.mxu0 0.0
        %386 = vmatpush1.xpose.msra.mxu0 0.0
        %387 = vmatprep.subr.mxu0 0.0
        %388 = vmatpush1.xpose.msra.mxu0 0.0
        %389 = vmatprep.mubr.f32.mxu0 0.0
        %390 = vmatmul.mubr.f32.gmra.mrb[0].mxu0 %v320
        %v391 = vpop.f32.mrb[0].mxu0
        %v392 = vadd.f32 0.0, %v391
        %v393 = vpop.f32.mrb[0].mxu0
        %394 = vdwg.mxu0
        %v395 = vsel %vm318, %v392, -inf
        %396 = vmax.xlane.f32.xlu0 %v395
        %v397 = vpop.xlane.xlu0 %396
        %v398 = vsub.f32 %v392, %v397
        %v399 = vmul.f32 %v398, 1.442695
        %v400 = vpow.pop %v399
        %v401 = vsel %vm318, %v400, 0.0
        %402 = vadd.xlane.f32.xlu0 %v401
        %v403 = vpop.xlane.xlu0 %402
        %v404 = vrcp.pop %v403
        %v405 = vmul.f32 %v400, %v404
        %406 = vst.msk [vmem:[%s313] sm:$0xff] %vm318, %v405
        %v408 = vsel %vm318, %v405, 0
        %410 = vmatprep.subr.mxu0 0.0
        %411 = vmatpush1.msra.mxu0 %v317
        %412 = vmatprep.subr.mxu0 0.0
        %413 = vmatpush1.msra.mxu0 0.0
        %414 = vmatprep.subr.mxu0 0.0
        %415 = vmatpush1.msra.mxu0 0.0
        %416 = vmatprep.subr.mxu0 0.0
        %417 = vmatpush1.msra.mxu0 0.0
        %418 = vmatprep.subr.mxu0 0.0
        %419 = vmatpush1.msra.mxu0 0.0
        %420 = vmatprep.subr.mxu0 0.0
        %421 = vmatpush1.msra.mxu0 0.0
        %422 = vmatprep.subr.mxu0 0.0
        %423 = vmatpush1.msra.mxu0 0.0
        %424 = vmatprep.subr.mxu0 0.0
        %425 = vmatpush1.msra.mxu0 0.0
        %426 = vmatprep.subr.mxu0 0.0
        %427 = vmatpush1.msra.mxu0 0.0
        %428 = vmatprep.subr.mxu0 0.0
        %429 = vmatpush1.msra.mxu0 0.0
        %430 = vmatprep.subr.mxu0 0.0
        %431 = vmatpush1.msra.mxu0 0.0
        %432 = vmatprep.subr.mxu0 0.0
        %433 = vmatpush1.msra.mxu0 0.0
        %434 = vmatprep.subr.mxu0 0.0
        %435 = vmatpush1.msra.mxu0 0.0
        %436 = vmatprep.subr.mxu0 0.0
        %437 = vmatpush1.msra.mxu0 0.0
        %438 = vmatprep.subr.mxu0 0.0
        %439 = vmatpush1.msra.mxu0 0.0
        %440 = vmatprep.subr.mxu0 0.0
        %441 = vmatpush1.msra.mxu0 0.0
        %442 = vmatprep.subr.mxu0 0.0
        %443 = vmatpush1.msra.mxu0 0.0
        %444 = vmatprep.subr.mxu0 0.0
        %445 = vmatpush1.msra.mxu0 0.0
        %446 = vmatprep.subr.mxu0 0.0
        %447 = vmatpush1.msra.mxu0 0.0
        %448 = vmatprep.subr.mxu0 0.0
        %449 = vmatpush1.msra.mxu0 0.0
        %450 = vmatprep.subr.mxu0 0.0
        %451 = vmatpush1.msra.mxu0 0.0
        %452 = vmatprep.subr.mxu0 0.0
        %453 = vmatpush1.msra.mxu0 0.0
        %454 = vmatprep.subr.mxu0 0.0
        %455 = vmatpush1.msra.mxu0 0.0
        %456 = vmatprep.subr.mxu0 0.0
        %457 = vmatpush1.msra.mxu0 0.0
        %458 = vmatprep.subr.mxu0 0.0
        %459 = vmatpush1.msra.mxu0 0.0
        %460 = vmatprep.subr.mxu0 0.0
        %461 = vmatpush1.msra.mxu0 0.0
        %462 = vmatprep.subr.mxu0 0.0
        %463 = vmatpush1.msra.mxu0 0.0
        %464 = vmatprep.subr.mxu0 0.0
        %465 = vmatpush1.msra.mxu0 0.0
        %466 = vmatprep.subr.mxu0 0.0
        %467 = vmatpush1.msra.mxu0 0.0
        %468 = vmatprep.subr.mxu0 0.0
        %469 = vmatpush1.msra.mxu0 0.0
        %470 = vmatprep.subr.mxu0 0.0
        %471 = vmatpush1.msra.mxu0 0.0
        %472 = vmatprep.subr.mxu0 0.0
        %473 = vmatpush1.msra.mxu0 0.0
        %474 = vmatprep.mubr.f32.mxu0 0.0
        %475 = vmatmul.mubr.f32.gmra.mrb[0].mxu0 %v408
        %v476 = vpop.f32.mrb[0].mxu0
        %v477 = vadd.f32 0.0, %v476
        %v478 = vpop.f32.mrb[0].mxu0
        %479 = vdwg.mxu0
        %480 = vst.msk [vmem:[#allocation2] sm:$0xff] %vm318, %v477
        %481 = vrot.lane.b32.xlu0 %v315, 120
        %v482 = vpop.permute.xlu0 %481
        %483 = vrot.lane.b32.xlu0 %v316, 120
        %v484 = vpop.permute.xlu0 %483
        %v485 = vsel %vm318, %v482, 0
        %v487 = vsel %vm318, %v484, 0
        %489 = vmatprep.subr.mxu0 0.0
        %490 = vmatpush1.xpose.msra.mxu0 %v487
        %491 = vmatprep.subr.mxu0 0.0
        %492 = vmatpush1.xpose.msra.mxu0 0.0
        %493 = vmatprep.subr.mxu0 0.0
        %494 = vmatpush1.xpose.msra.mxu0 0.0
        %495 = vmatprep.subr.mxu0 0.0
        %496 = vmatpush1.xpose.msra.mxu0 0.0
        %497 = vmatprep.subr.mxu0 0.0
        %498 = vmatpush1.xpose.msra.mxu0 0.0
        %499 = vmatprep.subr.mxu0 0.0
        %500 = vmatpush1.xpose.msra.mxu0 0.0
        %501 = vmatprep.subr.mxu0 0.0
        %502 = vmatpush1.xpose.msra.mxu0 0.0
        %503 = vmatprep.subr.mxu0 0.0
        %504 = vmatpush1.xpose.msra.mxu0 0.0
        %505 = vmatprep.subr.mxu0 0.0
        %506 = vmatpush1.xpose.msra.mxu0 0.0
        %507 = vmatprep.subr.mxu0 0.0
        %508 = vmatpush1.xpose.msra.mxu0 0.0
        %509 = vmatprep.subr.mxu0 0.0
        %510 = vmatpush1.xpose.msra.mxu0 0.0
        %511 = vmatprep.subr.mxu0 0.0
        %512 = vmatpush1.xpose.msra.mxu0 0.0
        %513 = vmatprep.subr.mxu0 0.0
        %514 = vmatpush1.xpose.msra.mxu0 0.0
        %515 = vmatprep.subr.mxu0 0.0
        %516 = vmatpush1.xpose.msra.mxu0 0.0
        %517 = vmatprep.subr.mxu0 0.0
        %518 = vmatpush1.xpose.msra.mxu0 0.0
        %519 = vmatprep.subr.mxu0 0.0
        %520 = vmatpush1.xpose.msra.mxu0 0.0
        %521 = vmatprep.subr.mxu0 0.0
        %522 = vmatpush1.xpose.msra.mxu0 0.0
        %523 = vmatprep.subr.mxu0 0.0
        %524 = vmatpush1.xpose.msra.mxu0 0.0
        %525 = vmatprep.subr.mxu0 0.0
        %526 = vmatpush1.xpose.msra.mxu0 0.0
        %527 = vmatprep.subr.mxu0 0.0
        %528 = vmatpush1.xpose.msra.mxu0 0.0
        %529 = vmatprep.subr.mxu0 0.0
        %530 = vmatpush1.xpose.msra.mxu0 0.0
        %531 = vmatprep.subr.mxu0 0.0
        %532 = vmatpush1.xpose.msra.mxu0 0.0
        %533 = vmatprep.subr.mxu0 0.0
        %534 = vmatpush1.xpose.msra.mxu0 0.0
        %535 = vmatprep.subr.mxu0 0.0
        %536 = vmatpush1.xpose.msra.mxu0 0.0
        %537 = vmatprep.subr.mxu0 0.0
        %538 = vmatpush1.xpose.msra.mxu0 0.0
        %539 = vmatprep.subr.mxu0 0.0
        %540 = vmatpush1.xpose.msra.mxu0 0.0
        %541 = vmatprep.subr.mxu0 0.0
        %542 = vmatpush1.xpose.msra.mxu0 0.0
        %543 = vmatprep.subr.mxu0 0.0
        %544 = vmatpush1.xpose.msra.mxu0 0.0
        %545 = vmatprep.subr.mxu0 0.0
        %546 = vmatpush1.xpose.msra.mxu0 0.0
        %547 = vmatprep.subr.mxu0 0.0
        %548 = vmatpush1.xpose.msra.mxu0 0.0
        %549 = vmatprep.subr.mxu0 0.0
        %550 = vmatpush1.xpose.msra.mxu0 0.0
        %551 = vmatprep.subr.mxu0 0.0
        %552 = vmatpush1.xpose.msra.mxu0 0.0
        %553 = vmatprep.mubr.f32.mxu0 0.0
        %554 = vmatmul.mubr.f32.gmra.mrb[0].mxu0 %v485
        %v555 = vpop.f32.mrb[0].mxu0
        %v556 = vadd.f32 0.0, %v555
        %v557 = vpop.f32.mrb[0].mxu0
        %558 = vdwg.mxu0
        %v559 = vsel %vm318, %v556, -inf
        %560 = vmax.xlane.f32.xlu0 %v559
        %v561 = vpop.xlane.xlu0 %560
        %v562 = vsub.f32 %v556, %v561
        %v563 = vmul.f32 %v562, 1.442695
        %v564 = vpow.pop %v563
        %v565 = vsel %vm318, %v564, 0.0
        %566 = vadd.xlane.f32.xlu0 %v565
        %v567 = vpop.xlane.xlu0 %566
        %v568 = vrcp.pop %v567
        %v569 = vmul.f32 %v564, %v568
        %s570 = scalar_lea.vmem %s313, 8 [#allocation10]
        %571 = vst.msk [vmem:[%s570] sm:$0xff] %vm318, %v569
        %573 = vrot.lane.b32.xlu0 %v317, 120
        %v574 = vpop.permute.xlu0 %573
        %v577 = vsel %vm318, %v569, 0
        %579 = vmatprep.subr.mxu0 0.0
        %580 = vmatpush1.msra.mxu0 %v574
        %581 = vmatprep.subr.mxu0 0.0
        %582 = vmatpush1.msra.mxu0 0.0
        %583 = vmatprep.subr.mxu0 0.0
        %584 = vmatpush1.msra.mxu0 0.0
        %585 = vmatprep.subr.mxu0 0.0
        %586 = vmatpush1.msra.mxu0 0.0
        %587 = vmatprep.subr.mxu0 0.0
        %588 = vmatpush1.msra.mxu0 0.0
        %589 = vmatprep.subr.mxu0 0.0
        %590 = vmatpush1.msra.mxu0 0.0
        %591 = vmatprep.subr.mxu0 0.0
        %592 = vmatpush1.msra.mxu0 0.0
        %593 = vmatprep.subr.mxu0 0.0
        %594 = vmatpush1.msra.mxu0 0.0
        %595 = vmatprep.subr.mxu0 0.0
        %596 = vmatpush1.msra.mxu0 0.0
        %597 = vmatprep.subr.mxu0 0.0
        %598 = vmatpush1.msra.mxu0 0.0
        %599 = vmatprep.subr.mxu0 0.0
        %600 = vmatpush1.msra.mxu0 0.0
        %601 = vmatprep.subr.mxu0 0.0
        %602 = vmatpush1.msra.mxu0 0.0
        %603 = vmatprep.subr.mxu0 0.0
        %604 = vmatpush1.msra.mxu0 0.0
        %605 = vmatprep.subr.mxu0 0.0
        %606 = vmatpush1.msra.mxu0 0.0
        %607 = vmatprep.subr.mxu0 0.0
        %608 = vmatpush1.msra.mxu0 0.0
        %609 = vmatprep.subr.mxu0 0.0
        %610 = vmatpush1.msra.mxu0 0.0
        %611 = vmatprep.subr.mxu0 0.0
        %612 = vmatpush1.msra.mxu0 0.0
        %613 = vmatprep.subr.mxu0 0.0
        %614 = vmatpush1.msra.mxu0 0.0
        %615 = vmatprep.subr.mxu0 0.0
        %616 = vmatpush1.msra.mxu0 0.0
        %617 = vmatprep.subr.mxu0 0.0
        %618 = vmatpush1.msra.mxu0 0.0
        %619 = vmatprep.subr.mxu0 0.0
        %620 = vmatpush1.msra.mxu0 0.0
        %621 = vmatprep.subr.mxu0 0.0
        %622 = vmatpush1.msra.mxu0 0.0
        %623 = vmatprep.subr.mxu0 0.0
        %624 = vmatpush1.msra.mxu0 0.0
        %625 = vmatprep.subr.mxu0 0.0
        %626 = vmatpush1.msra.mxu0 0.0
        %627 = vmatprep.subr.mxu0 0.0
        %628 = vmatpush1.msra.mxu0 0.0
        %629 = vmatprep.subr.mxu0 0.0
        %630 = vmatpush1.msra.mxu0 0.0
        %631 = vmatprep.subr.mxu0 0.0
        %632 = vmatpush1.msra.mxu0 0.0
        %633 = vmatprep.subr.mxu0 0.0
        %634 = vmatpush1.msra.mxu0 0.0
        %635 = vmatprep.subr.mxu0 0.0
        %636 = vmatpush1.msra.mxu0 0.0
        %637 = vmatprep.subr.mxu0 0.0
        %638 = vmatpush1.msra.mxu0 0.0
        %639 = vmatprep.subr.mxu0 0.0
        %640 = vmatpush1.msra.mxu0 0.0
        %641 = vmatprep.subr.mxu0 0.0
        %642 = vmatpush1.msra.mxu0 0.0
        %643 = vmatprep.mubr.f32.mxu0 0.0
        %644 = vmatmul.mubr.f32.gmra.mrb[0].mxu0 %v577
        %v645 = vpop.f32.mrb[0].mxu0
        %v646 = vadd.f32 0.0, %v645
        %v647 = vpop.f32.mrb[0].mxu0
        %648 = vdwg.mxu0
        %650 = vrot.lane.b32.xlu0 %v646, 8
        %v651 = vpop.permute.xlu0 %650
        %vm653 = vcmask 130112
        %654 = vst.msk [vmem:[#allocation2] sm:$0xff] %vm653, %v651
        %655 = vrot.lane.b32.xlu0 %v315, 112
        %v656 = vpop.permute.xlu0 %655
        %657 = vrot.lane.b32.xlu0 %v316, 112
        %v658 = vpop.permute.xlu0 %657
        %v659 = vsel %vm318, %v656, 0
        %v661 = vsel %vm318, %v658, 0
        %663 = vmatprep.subr.mxu0 0.0
        %664 = vmatpush1.xpose.msra.mxu0 %v661
        %665 = vmatprep.subr.mxu0 0.0
        %666 = vmatpush1.xpose.msra.mxu0 0.0
        %667 = vmatprep.subr.mxu0 0.0
        %668 = vmatpush1.xpose.msra.mxu0 0.0
        %669 = vmatprep.subr.mxu0 0.0
        %670 = vmatpush1.xpose.msra.mxu0 0.0
        %671 = vmatprep.subr.mxu0 0.0
        %672 = vmatpush1.xpose.msra.mxu0 0.0
        %673 = vmatprep.subr.mxu0 0.0
        %674 = vmatpush1.xpose.msra.mxu0 0.0
        %675 = vmatprep.subr.mxu0 0.0
        %676 = vmatpush1.xpose.msra.mxu0 0.0
        %677 = vmatprep.subr.mxu0 0.0
        %678 = vmatpush1.xpose.msra.mxu0 0.0
        %679 = vmatprep.subr.mxu0 0.0
        %680 = vmatpush1.xpose.msra.mxu0 0.0
        %681 = vmatprep.subr.mxu0 0.0
        %682 = vmatpush1.xpose.msra.mxu0 0.0
        %683 = vmatprep.subr.mxu0 0.0
        %684 = vmatpush1.xpose.msra.mxu0 0.0
        %685 = vmatprep.subr.mxu0 0.0
        %686 = vmatpush1.xpose.msra.mxu0 0.0
        %687 = vmatprep.subr.mxu0 0.0
        %688 = vmatpush1.xpose.msra.mxu0 0.0
        %689 = vmatprep.subr.mxu0 0.0
        %690 = vmatpush1.xpose.msra.mxu0 0.0
        %691 = vmatprep.subr.mxu0 0.0
        %692 = vmatpush1.xpose.msra.mxu0 0.0
        %693 = vmatprep.subr.mxu0 0.0
        %694 = vmatpush1.xpose.msra.mxu0 0.0
        %695 = vmatprep.subr.mxu0 0.0
        %696 = vmatpush1.xpose.msra.mxu0 0.0
        %697 = vmatprep.subr.mxu0 0.0
        %698 = vmatpush1.xpose.msra.mxu0 0.0
        %699 = vmatprep.subr.mxu0 0.0
        %700 = vmatpush1.xpose.msra.mxu0 0.0
        %701 = vmatprep.subr.mxu0 0.0
        %702 = vmatpush1.xpose.msra.mxu0 0.0
        %703 = vmatprep.subr.mxu0 0.0
        %704 = vmatpush1.xpose.msra.mxu0 0.0
        %705 = vmatprep.subr.mxu0 0.0
        %706 = vmatpush1.xpose.msra.mxu0 0.0
        %707 = vmatprep.subr.mxu0 0.0
        %708 = vmatpush1.xpose.msra.mxu0 0.0
        %709 = vmatprep.subr.mxu0 0.0
        %710 = vmatpush1.xpose.msra.mxu0 0.0
        %711 = vmatprep.subr.mxu0 0.0
        %712 = vmatpush1.xpose.msra.mxu0 0.0
        %713 = vmatprep.subr.mxu0 0.0
        %714 = vmatpush1.xpose.msra.mxu0 0.0
        %715 = vmatprep.subr.mxu0 0.0
        %716 = vmatpush1.xpose.msra.mxu0 0.0
        %717 = vmatprep.subr.mxu0 0.0
        %718 = vmatpush1.xpose.msra.mxu0 0.0
        %719 = vmatprep.subr.mxu0 0.0
        %720 = vmatpush1.xpose.msra.mxu0 0.0
        %721 = vmatprep.subr.mxu0 0.0
        %722 = vmatpush1.xpose.msra.mxu0 0.0
        %723 = vmatprep.subr.mxu0 0.0
        %724 = vmatpush1.xpose.msra.mxu0 0.0
        %725 = vmatprep.subr.mxu0 0.0
        %726 = vmatpush1.xpose.msra.mxu0 0.0
        %727 = vmatprep.mubr.f32.mxu0 0.0
        %728 = vmatmul.mubr.f32.gmra.mrb[0].mxu0 %v659
        %v729 = vpop.f32.mrb[0].mxu0
        %v730 = vadd.f32 0.0, %v729
        %v731 = vpop.f32.mrb[0].mxu0
        %732 = vdwg.mxu0
        %v733 = vsel %vm318, %v730, -inf
        %734 = vmax.xlane.f32.xlu0 %v733
        %v735 = vpop.xlane.xlu0 %734
        %v736 = vsub.f32 %v730, %v735
        %v737 = vmul.f32 %v736, 1.442695
        %v738 = vpow.pop %v737
        %v739 = vsel %vm318, %v738, 0.0
        %740 = vadd.xlane.f32.xlu0 %v739
        %v741 = vpop.xlane.xlu0 %740
        %v742 = vrcp.pop %v741
        %v743 = vmul.f32 %v738, %v742
        %s744 = scalar_lea.vmem %s313, 16 [#allocation10]
        %745 = vst.msk [vmem:[%s744] sm:$0xff] %vm318, %v743
        %746 = vrot.lane.b32.xlu0 %v317, 112
        %v747 = vpop.permute.xlu0 %746
        %v750 = vsel %vm318, %v743, 0
        %752 = vmatprep.subr.mxu0 0.0
        %753 = vmatpush1.msra.mxu0 %v747
        %754 = vmatprep.subr.mxu0 0.0
        %755 = vmatpush1.msra.mxu0 0.0
        %756 = vmatprep.subr.mxu0 0.0
        %757 = vmatpush1.msra.mxu0 0.0
        %758 = vmatprep.subr.mxu0 0.0
        %759 = vmatpush1.msra.mxu0 0.0
        %760 = vmatprep.subr.mxu0 0.0
        %761 = vmatpush1.msra.mxu0 0.0
        %762 = vmatprep.subr.mxu0 0.0
        %763 = vmatpush1.msra.mxu0 0.0
        %764 = vmatprep.subr.mxu0 0.0
        %765 = vmatpush1.msra.mxu0 0.0
        %766 = vmatprep.subr.mxu0 0.0
        %767 = vmatpush1.msra.mxu0 0.0
        %768 = vmatprep.subr.mxu0 0.0
        %769 = vmatpush1.msra.mxu0 0.0
        %770 = vmatprep.subr.mxu0 0.0
        %771 = vmatpush1.msra.mxu0 0.0
        %772 = vmatprep.subr.mxu0 0.0
        %773 = vmatpush1.msra.mxu0 0.0
        %774 = vmatprep.subr.mxu0 0.0
        %775 = vmatpush1.msra.mxu0 0.0
        %776 = vmatprep.subr.mxu0 0.0
        %777 = vmatpush1.msra.mxu0 0.0
        %778 = vmatprep.subr.mxu0 0.0
        %779 = vmatpush1.msra.mxu0 0.0
        %780 = vmatprep.subr.mxu0 0.0
        %781 = vmatpush1.msra.mxu0 0.0
        %782 = vmatprep.subr.mxu0 0.0
        %783 = vmatpush1.msra.mxu0 0.0
        %784 = vmatprep.subr.mxu0 0.0
        %785 = vmatpush1.msra.mxu0 0.0
        %786 = vmatprep.subr.mxu0 0.0
        %787 = vmatpush1.msra.mxu0 0.0
        %788 = vmatprep.subr.mxu0 0.0
        %789 = vmatpush1.msra.mxu0 0.0
        %790 = vmatprep.subr.mxu0 0.0
        %791 = vmatpush1.msra.mxu0 0.0
        %792 = vmatprep.subr.mxu0 0.0
        %793 = vmatpush1.msra.mxu0 0.0
        %794 = vmatprep.subr.mxu0 0.0
        %795 = vmatpush1.msra.mxu0 0.0
        %796 = vmatprep.subr.mxu0 0.0
        %797 = vmatpush1.msra.mxu0 0.0
        %798 = vmatprep.subr.mxu0 0.0
        %799 = vmatpush1.msra.mxu0 0.0
        %800 = vmatprep.subr.mxu0 0.0
        %801 = vmatpush1.msra.mxu0 0.0
        %802 = vmatprep.subr.mxu0 0.0
        %803 = vmatpush1.msra.mxu0 0.0
        %804 = vmatprep.subr.mxu0 0.0
        %805 = vmatpush1.msra.mxu0 0.0
        %806 = vmatprep.subr.mxu0 0.0
        %807 = vmatpush1.msra.mxu0 0.0
        %808 = vmatprep.subr.mxu0 0.0
        %809 = vmatpush1.msra.mxu0 0.0
        %810 = vmatprep.subr.mxu0 0.0
        %811 = vmatpush1.msra.mxu0 0.0
        %812 = vmatprep.subr.mxu0 0.0
        %813 = vmatpush1.msra.mxu0 0.0
        %814 = vmatprep.subr.mxu0 0.0
        %815 = vmatpush1.msra.mxu0 0.0
        %816 = vmatprep.mubr.f32.mxu0 0.0
        %817 = vmatmul.mubr.f32.gmra.mrb[0].mxu0 %v750
        %v818 = vpop.f32.mrb[0].mxu0
        %v819 = vadd.f32 0.0, %v818
        %v820 = vpop.f32.mrb[0].mxu0
        %821 = vdwg.mxu0
        %823 = vrot.lane.b32.xlu0 %v819, 16
        %v824 = vpop.permute.xlu0 %823
        %vm826 = vcmask 195712
        %827 = vst.msk [vmem:[#allocation2] sm:$0xff] %vm826, %v824
        %828 = vrot.lane.b32.xlu0 %v315, 104
        %v829 = vpop.permute.xlu0 %828
        %830 = vrot.lane.b32.xlu0 %v316, 104
        %v831 = vpop.permute.xlu0 %830
        %v832 = vsel %vm318, %v829, 0
        %v834 = vsel %vm318, %v831, 0
        %836 = vmatprep.subr.mxu0 0.0
        %837 = vmatpush1.xpose.msra.mxu0 %v834
        %838 = vmatprep.subr.mxu0 0.0
        %839 = vmatpush1.xpose.msra.mxu0 0.0
        %840 = vmatprep.subr.mxu0 0.0
        %841 = vmatpush1.xpose.msra.mxu0 0.0
        %842 = vmatprep.subr.mxu0 0.0
        %843 = vmatpush1.xpose.msra.mxu0 0.0
        %844 = vmatprep.subr.mxu0 0.0
        %845 = vmatpush1.xpose.msra.mxu0 0.0
        %846 = vmatprep.subr.mxu0 0.0
        %847 = vmatpush1.xpose.msra.mxu0 0.0
        %848 = vmatprep.subr.mxu0 0.0
        %849 = vmatpush1.xpose.msra.mxu0 0.0
        %850 = vmatprep.subr.mxu0 0.0
        %851 = vmatpush1.xpose.msra.mxu0 0.0
        %852 = vmatprep.subr.mxu0 0.0
        %853 = vmatpush1.xpose.msra.mxu0 0.0
        %854 = vmatprep.subr.mxu0 0.0
        %855 = vmatpush1.xpose.msra.mxu0 0.0
        %856 = vmatprep.subr.mxu0 0.0
        %857 = vmatpush1.xpose.msra.mxu0 0.0
        %858 = vmatprep.subr.mxu0 0.0
        %859 = vmatpush1.xpose.msra.mxu0 0.0
        %860 = vmatprep.subr.mxu0 0.0
        %861 = vmatpush1.xpose.msra.mxu0 0.0
        %862 = vmatprep.subr.mxu0 0.0
        %863 = vmatpush1.xpose.msra.mxu0 0.0
        %864 = vmatprep.subr.mxu0 0.0
        %865 = vmatpush1.xpose.msra.mxu0 0.0
        %866 = vmatprep.subr.mxu0 0.0
        %867 = vmatpush1.xpose.msra.mxu0 0.0
        %868 = vmatprep.subr.mxu0 0.0
        %869 = vmatpush1.xpose.msra.mxu0 0.0
        %870 = vmatprep.subr.mxu0 0.0
        %871 = vmatpush1.xpose.msra.mxu0 0.0
        %872 = vmatprep.subr.mxu0 0.0
        %873 = vmatpush1.xpose.msra.mxu0 0.0
        %874 = vmatprep.subr.mxu0 0.0
        %875 = vmatpush1.xpose.msra.mxu0 0.0
        %876 = vmatprep.subr.mxu0 0.0
        %877 = vmatpush1.xpose.msra.mxu0 0.0
        %878 = vmatprep.subr.mxu0 0.0
        %879 = vmatpush1.xpose.msra.mxu0 0.0
        %880 = vmatprep.subr.mxu0 0.0
        %881 = vmatpush1.xpose.msra.mxu0 0.0
        %882 = vmatprep.subr.mxu0 0.0
        %883 = vmatpush1.xpose.msra.mxu0 0.0
        %884 = vmatprep.subr.mxu0 0.0
        %885 = vmatpush1.xpose.msra.mxu0 0.0
        %886 = vmatprep.subr.mxu0 0.0
        %887 = vmatpush1.xpose.msra.mxu0 0.0
        %888 = vmatprep.subr.mxu0 0.0
        %889 = vmatpush1.xpose.msra.mxu0 0.0
        %890 = vmatprep.subr.mxu0 0.0
        %891 = vmatpush1.xpose.msra.mxu0 0.0
        %892 = vmatprep.subr.mxu0 0.0
        %893 = vmatpush1.xpose.msra.mxu0 0.0
        %894 = vmatprep.subr.mxu0 0.0
        %895 = vmatpush1.xpose.msra.mxu0 0.0
        %896 = vmatprep.subr.mxu0 0.0
        %897 = vmatpush1.xpose.msra.mxu0 0.0
        %898 = vmatprep.subr.mxu0 0.0
        %899 = vmatpush1.xpose.msra.mxu0 0.0
        %900 = vmatprep.mubr.f32.mxu0 0.0
        %901 = vmatmul.mubr.f32.gmra.mrb[0].mxu0 %v832
        %v902 = vpop.f32.mrb[0].mxu0
        %v903 = vadd.f32 0.0, %v902
        %v904 = vpop.f32.mrb[0].mxu0
        %905 = vdwg.mxu0
        %v906 = vsel %vm318, %v903, -inf
        %907 = vmax.xlane.f32.xlu0 %v906
        %v908 = vpop.xlane.xlu0 %907
        %v909 = vsub.f32 %v903, %v908
        %v910 = vmul.f32 %v909, 1.442695
        %v911 = vpow.pop %v910
        %v912 = vsel %vm318, %v911, 0.0
        %913 = vadd.xlane.f32.xlu0 %v912
        %v914 = vpop.xlane.xlu0 %913
        %v915 = vrcp.pop %v914
        %v916 = vmul.f32 %v911, %v915
        %s917 = scalar_lea.vmem %s313, 24 [#allocation10]
        %918 = vst.msk [vmem:[%s917] sm:$0xff] %vm318, %v916
        %919 = vrot.lane.b32.xlu0 %v317, 104
        %v920 = vpop.permute.xlu0 %919
        %v923 = vsel %vm318, %v916, 0
        %925 = vmatprep.subr.mxu0 0.0
        %926 = vmatpush1.msra.mxu0 %v920
        %927 = vmatprep.subr.mxu0 0.0
        %928 = vmatpush1.msra.mxu0 0.0
        %929 = vmatprep.subr.mxu0 0.0
        %930 = vmatpush1.msra.mxu0 0.0
        %931 = vmatprep.subr.mxu0 0.0
        %932 = vmatpush1.msra.mxu0 0.0
        %933 = vmatprep.subr.mxu0 0.0
        %934 = vmatpush1.msra.mxu0 0.0
        %935 = vmatprep.subr.mxu0 0.0
        %936 = vmatpush1.msra.mxu0 0.0
        %937 = vmatprep.subr.mxu0 0.0
        %938 = vmatpush1.msra.mxu0 0.0
        %939 = vmatprep.subr.mxu0 0.0
        %940 = vmatpush1.msra.mxu0 0.0
        %941 = vmatprep.subr.mxu0 0.0
        %942 = vmatpush1.msra.mxu0 0.0
        %943 = vmatprep.subr.mxu0 0.0
        %944 = vmatpush1.msra.mxu0 0.0
        %945 = vmatprep.subr.mxu0 0.0
        %946 = vmatpush1.msra.mxu0 0.0
        %947 = vmatprep.subr.mxu0 0.0
        %948 = vmatpush1.msra.mxu0 0.0
        %949 = vmatprep.subr.mxu0 0.0
        %950 = vmatpush1.msra.mxu0 0.0
        %951 = vmatprep.subr.mxu0 0.0
        %952 = vmatpush1.msra.mxu0 0.0
        %953 = vmatprep.subr.mxu0 0.0
        %954 = vmatpush1.msra.mxu0 0.0
        %955 = vmatprep.subr.mxu0 0.0
        %956 = vmatpush1.msra.mxu0 0.0
        %957 = vmatprep.subr.mxu0 0.0
        %958 = vmatpush1.msra.mxu0 0.0
        %959 = vmatprep.subr.mxu0 0.0
        %960 = vmatpush1.msra.mxu0 0.0
        %961 = vmatprep.subr.mxu0 0.0
        %962 = vmatpush1.msra.mxu0 0.0
        %963 = vmatprep.subr.mxu0 0.0
        %964 = vmatpush1.msra.mxu0 0.0
        %965 = vmatprep.subr.mxu0 0.0
        %966 = vmatpush1.msra.mxu0 0.0
        %967 = vmatprep.subr.mxu0 0.0
        %968 = vmatpush1.msra.mxu0 0.0
        %969 = vmatprep.subr.mxu0 0.0
        %970 = vmatpush1.msra.mxu0 0.0
        %971 = vmatprep.subr.mxu0 0.0
        %972 = vmatpush1.msra.mxu0 0.0
        %973 = vmatprep.subr.mxu0 0.0
        %974 = vmatpush1.msra.mxu0 0.0
        %975 = vmatprep.subr.mxu0 0.0
        %976 = vmatpush1.msra.mxu0 0.0
        %977 = vmatprep.subr.mxu0 0.0
        %978 = vmatpush1.msra.mxu0 0.0
        %979 = vmatprep.subr.mxu0 0.0
        %980 = vmatpush1.msra.mxu0 0.0
        %981 = vmatprep.subr.mxu0 0.0
        %982 = vmatpush1.msra.mxu0 0.0
        %983 = vmatprep.subr.mxu0 0.0
        %984 = vmatpush1.msra.mxu0 0.0
        %985 = vmatprep.subr.mxu0 0.0
        %986 = vmatpush1.msra.mxu0 0.0
        %987 = vmatprep.subr.mxu0 0.0
        %988 = vmatpush1.msra.mxu0 0.0
        %989 = vmatprep.mubr.f32.mxu0 0.0
        %990 = vmatmul.mubr.f32.gmra.mrb[0].mxu0 %v923
        %v991 = vpop.f32.mrb[0].mxu0
        %v992 = vadd.f32 0.0, %v991
        %v993 = vpop.f32.mrb[0].mxu0
        %994 = vdwg.mxu0
        %996 = vrot.lane.b32.xlu0 %v992, 24
        %v997 = vpop.permute.xlu0 %996
        %vm999 = vcmask 261312
        %1000 = vst.msk [vmem:[#allocation2] sm:$0xff] %vm999, %v997
        %v1001 = vld [vmem:[#allocation2] sm:$0xff]
        %vm1002 = vcmask 261120
        %1003 = vst.msk [vmem:[%s306] sm:$0xff] %vm1002, %v1001
        %s1004 = sand.u32 %s130, 1
        %s1005 = scalar_lea.sflag [#allocation5], %s1004
        %s1006 = sand.u32 %s130, 1
        %s1007 = smul.addr %s1006, 8
        %s1008 = scalar_lea.vmem [#allocation9], %s1007
        %s1009 = sand.u32 %s158, 1
        %s1010 = scalar_lea.sflag [#allocation11], %s1009
        %s1011 = sand.u32 %s158, 1
        %s1012 = smul.addr %s1011, 32
        %s1013 = scalar_lea.vmem [#allocation10], %s1012
        // Predicated region
        $region45: #{tpu_custom_call.1} parent=31 // pred_check
          %p1014 = pneg %p140
        $region46: #{tpu_custom_call.1} parent=31 // pred_check_branch
          %1016 = sbr.rel (%p1014) target = $region48
        $region47: #{tpu_custom_call.1} parent=31 // pred_region
          %s1018 = ssub.s32 128, 128
          %1019 = vsyncadd %s1005, %s1018
          %s1020 = sadd.s32 %s33, %s32
          %s1021 = smul.addr %s1020, 128
          %s1022 = scalar_lea.hbm %s3, %s1021
          %s1024 = sshll.u32 %s1008, 4
          %s1025 = int_to_ptr.vmem [resolvable:$true] %s1024
          %1027 = dma.vmem_to_hbm [thread:$0]  %s1025, 128, %s1022, %s1005
        $region48: #{tpu_custom_call.1} parent=31 // pred_fallthru
          _
        // Predicated region
        $region49: #{tpu_custom_call.1} parent=31 // pred_check
          %p1028 = pneg %p168
        $region50: #{tpu_custom_call.1} parent=31 // pred_check_branch
          %1030 = sbr.rel (%p1028) target = $region52
        $region51: #{tpu_custom_call.1} parent=31 // pred_region
          %s1032 = ssub.s32 512, 512
          %1033 = vsyncadd %s1010, %s1032
          %s1034 = smul.addr %s32, 4
          %s1035 = sadd.s32 %s33, %s1034
          %s1036 = smul.addr %s1035, 128
          %s1037 = scalar_lea.hbm %s4, %s1036
          %s1038 = sshll.u32 %s1013, 4
          %s1039 = int_to_ptr.vmem [resolvable:$true] %s1038
          %1044 = dma.vmem_to_hbm [thread:$0]  %s1039, 512, %s1037, %s1010, 128, 128, 8
        $region52: #{tpu_custom_call.1} parent=31 // pred_fallthru
          _
      $region32: #{tpu_custom_call.1} parent=5 // pred_fallthru
        _
      %p1045 = scmp.le.s32.totalorder 2, %s23
      // Predicated region
      $region53: #{tpu_custom_call.1} parent=5 // pred_check
        %p1046 = pneg %p1045
      $region54: #{tpu_custom_call.1} parent=5 // pred_check_branch
        %1048 = sbr.rel (%p1046) target = $region56
      $region55: #{tpu_custom_call.1} parent=5 // pred_region
        %s1049 = ssub.s32 %s23, 2
        // Predicated region
        $region57: #{tpu_custom_call.1} parent=55 // pred_check
          %p1050 = pneg %p146
        $region58: #{tpu_custom_call.1} parent=55 // pred_check_branch
          %1052 = sbr.rel (%p1050) target = $region60
        $region59: #{tpu_custom_call.1} parent=55 // pred_region
          %s1053 = sand.u32 %s131, 1
          %s1054 = scalar_lea.sflag [#allocation5], %s1053
          %s1055 = sand.u32 %s131, 1
          %s1056 = smul.addr %s1055, 8
          %s1057 = scalar_lea.vmem [#allocation9], %s1056
          %1058 = dma.done %s1054, 128
        $region60: #{tpu_custom_call.1} parent=55 // pred_fallthru
          _
        // Predicated region
        $region61: #{tpu_custom_call.1} parent=55 // pred_check
          %p1059 = pneg %p174
        $region62: #{tpu_custom_call.1} parent=55 // pred_check_branch
          %1061 = sbr.rel (%p1059) target = $region64
        $region63: #{tpu_custom_call.1} parent=55 // pred_region
          %s1062 = sand.u32 %s159, 1
          %s1063 = scalar_lea.sflag [#allocation11], %s1062
          %s1064 = sand.u32 %s159, 1
          %s1065 = smul.addr %s1064, 32
          %s1066 = scalar_lea.vmem [#allocation10], %s1065
          %1067 = dma.done %s1063, 512
        $region64: #{tpu_custom_call.1} parent=55 // pred_fallthru
          _
      $region56: #{tpu_custom_call.1} parent=5 // pred_fallthru
        _
    $region6: #{tpu_custom_call.1} parent=1 // loop_footer
      %s27 = sadd.s32 1, %s23
    $region7: #{tpu_custom_call.1} parent=1 // loop_footer_branch
      %22 = sbr.rel target = $region3
    $region8: #{tpu_custom_call.1} parent=1 // loop_exit
      _
    %1068 = vsyncpa [#allocation4], 1
    %s1069 = scalar_lea.sflag [#allocation4], 1
    %1070 = vsyncpa %s1069, 1
    %1071 = vsyncpa [#allocation7], 1
    %s1072 = scalar_lea.sflag [#allocation7], 1
    %1073 = vsyncpa %s1072, 1
    %1074 = vsyncpa [#allocation5], 1
    %s1075 = scalar_lea.sflag [#allocation5], 1
    %1076 = vsyncpa %s1075, 1
    %1077 = vsyncpa [#allocation11], 1
    %s1078 = scalar_lea.sflag [#allocation11], 1
    %1079 = vsyncpa %s1078, 1

</llo_original>
